<compile_context>
chip_gen: v7x
topology: tpu7x:2x2x1
jax: 0.10.0
libtpu: 0.0.40
codegen_flags: <defaults>
</compile_context>

<pallas_src>
import math

import jax
import jax.numpy as jnp
from jax.experimental import pallas as pl
from jax.experimental.pallas import tpu as pltpu


# ---------------------------------------------------------------------------
# Buffer construction (mirrors the PyTorch __init__ / register_buffer)
# ---------------------------------------------------------------------------

def _build_pe_table(max_seq_len, n_embd, dtype=jnp.float32):
    # Same latent assumption as the PyTorch original: n_embd must be even.
    assert n_embd % 2 == 0, "n_embd must be even (matches the PyTorch module)"
    position = jnp.arange(max_seq_len, dtype=jnp.float32)[:, None]            # (L, 1)
    div_term = jnp.exp(jnp.arange(0, n_embd, 2, dtype=jnp.float32)
                       * (-math.log(10000.0) / n_embd))                       # (C/2,)
    angles = position * div_term                                              # (L, C/2)
    pe = jnp.zeros((max_seq_len, n_embd), jnp.float32)
    pe = pe.at[:, 0::2].set(jnp.sin(angles))
    pe = pe.at[:, 1::2].set(jnp.cos(angles))
    return pe.astype(dtype)[None]                                             # (1, L, C)


# ---------------------------------------------------------------------------
# Kernel: forward(seq_len) = pe[:, :seq_len, :]  (single HBM->HBM DMA)
# ---------------------------------------------------------------------------

def _copy_kernel(pe_hbm, out_hbm, sem):
    # out_hbm has shape (1, seq_len, n_embd); copy exactly those rows of the
    # stored table with one DMA.  No VMEM staging, no grid, no edge masking.
    seq_len = out_hbm.shape[1]
    cp = pltpu.make_async_copy(pe_hbm.at[:, pl.ds(0, seq_len), :], out_hbm, sem)
    cp.start()
    cp.wait()


class PositionalEmbedding:
    """JAX/Pallas port of the PyTorch PositionalEmbedding module."""

    def __init__(self, n_embd, max_seq_len=512, dtype=jnp.float32):
        self.n_embd = n_embd
        self.max_seq_len = max_seq_len
        # Built once at module init, exactly like register_buffer.
        self.pe = _build_pe_table(max_seq_len, n_embd, dtype)   # (1, L, C)

    def __call__(self, seq_len):
        return self.forward(seq_len)

    def forward(self, seq_len):
        # seq_len is a static Python int (same as the PyTorch module, which
        # slices with a Python int).  Each distinct value compiles its own
        # (tiny) copy kernel; a traced seq_len is not supported here.
        seq_len = int(seq_len)
        assert 1 <= seq_len <= self.max_seq_len, "seq_len out of range"

        return pl.pallas_call(
            _copy_kernel,
            out_shape=jax.ShapeDtypeStruct((1, seq_len, self.n_embd),
                                           self.pe.dtype),
            in_specs=[pl.BlockSpec(memory_space=pl.ANY)],
            out_specs=pl.BlockSpec(memory_space=pl.ANY),
            scratch_shapes=[pltpu.SemaphoreType.DMA(())],
        )(self.pe)


# ---------------------------------------------------------------------------
# Demo / correctness check
# ---------------------------------------------------------------------------

def _reference(seq_len, n_embd):
    pos = jnp.arange(seq_len, dtype=jnp.float32)[:, None]
    div = jnp.exp(jnp.arange(0, n_embd, 2, dtype=jnp.float32)
                  * (-math.log(10000.0) / n_embd))
    ang = pos * div
    ref = jnp.zeros((seq_len, n_embd), jnp.float32)
    return ref.at[:, 0::2].set(jnp.sin(ang)).at[:, 1::2].set(jnp.cos(ang))


if __name__ == "__main__":
    # The module's forward takes only an integer seq_len (no tensor inputs);
    # the key is created for form only.
    _ = jax.random.PRNGKey(0)

    n_embd, max_seq_len = 128, 64
    module = PositionalEmbedding(n_embd, max_seq_len)

    # Primary run (seq_len = 16) + a non-multiple-of-8 seq_len to show the
    # direct-DMA path needs no alignment padding or post-kernel trimming.
    for seq_len in (16, 13):
        out = jax.block_until_ready(module(seq_len))
        assert out.shape == (1, seq_len, n_embd), out.shape
        ref = _reference(seq_len, n_embd)
        assert jnp.allclose(out[0], ref, atol=1e-6, rtol=1e-6), \
            f"mismatch vs reference at seq_len={seq_len}"

    print("KERNEL_OK")
</pallas_src>

<mosaic_0001>
module attributes {stable_mosaic.version = 11 : i64} {
  func.func @_copy_kernel(%arg0: memref<1x64x128xf32, #tpu.memory_space<any>>, %arg1: memref<1x16x128xf32, #tpu.memory_space<any>>, %arg2: memref<!tpu.dma_semaphore, #tpu.memory_space<semaphore_mem>>) attributes {dimension_semantics = [], scalar_prefetch = 0 : i64, scratch_operands = 1 : i64, tpu.core_type = #tpu.core_type<tc>} {
    %c0_i32 = arith.constant 0 : i32
    %c0_i32_0 = arith.constant 0 : i32
    %c0_i32_1 = arith.constant 0 : i32
    %0 = tpu.memref_slice %arg0[%c0_i32, %c0_i32_0, %c0_i32_1] : memref<1x64x128xf32, #tpu.memory_space<any>> -> memref<1x16x128xf32, #tpu.memory_space<any>>
    tpu.enqueue_dma source(%0 : memref<1x16x128xf32, #tpu.memory_space<any>>) target(%arg1 : memref<1x16x128xf32, #tpu.memory_space<any>>) target_semaphore(%arg2 : memref<!tpu.dma_semaphore, #tpu.memory_space<semaphore_mem>>)
    %c0_i32_2 = arith.constant 0 : i32
    %c0_i32_3 = arith.constant 0 : i32
    %c0_i32_4 = arith.constant 0 : i32
    %1 = tpu.memref_slice %arg0[%c0_i32_2, %c0_i32_3, %c0_i32_4] : memref<1x64x128xf32, #tpu.memory_space<any>> -> memref<1x16x128xf32, #tpu.memory_space<any>>
    tpu.wait_dma2 semaphore(%arg2 : memref<!tpu.dma_semaphore, #tpu.memory_space<semaphore_mem>>) src(%1 : memref<1x16x128xf32, #tpu.memory_space<any>>) dst(%arg1 : memref<1x16x128xf32, #tpu.memory_space<any>>)
    return
  }
}

</mosaic_0001>

<llo_original>
// kernel: tpu_custom_call.1
$region0: #{tpu_custom_call.1}
  #allocation0 [shape = 'u32[]', space=smem, size = 0x4, offset = 0x4, fixed_abs, tag = 'smem constant byte address 0x4 - core index']
  #allocation1 [shape = 'u32[144,128]{1,0:T(1,128)}', space=vmem, size = 0x12000, scoped, tag = 'internal scratch']
  #allocation2 [shape = 's32[1]{0}', space=sflag, size = 0x4, scoped, tag = 'scratch operand']
  #allocation3 [shape = 's32[]', space=sflag, size = 0x4, offset = 0, fixed_abs, tag = 'sflag constant byte address 0x0 - dummy sync flag']
  #allocation4 [shape = 'u32[0]{0}', space=smem, size = 0, offset = 0, fixed_abs, tag = 'smem constant byte address 0x0 - null']
  %s0 = inlined_call_operand.hbm [shape: f32[1,64,128], index: 0, kind: input, shape index: {}]
  %s1 = inlined_call_operand.hbm [shape: f32[1,16,128], index: 1, kind: output, shape index: {}]
  %s2 = sld [smem:[#allocation0]]
  $region2: #{tpu_custom_call.1} parent=0
    _
  %s4 = ssub.s32 1, %s2
  %s5 = scalar_select 0, %s4, %s2
  %s7 = sshll.u32 1, 14
  %s8 = sxor.u32 4294967295, %s7
  %s11 = sshll.u32 3, 24
  %s12 = sxor.u32 4294967295, %s11
  %s13 = sand.u32 0, %s12
  %s15 = sor.u32 %s13, 0
  %18 = dma.general %s0, 256, %s1, [#allocation2], [#allocation3], [#allocation4], %s15, 0
  %s19 = smul.u32 1, 16
  %s20 = smul.u32 %s19, 1
  %s21 = sshll.u32 %s20, 4
  %22 = dma.done [#allocation2], %s21
  %23 = vsyncmov [#allocation2]
  %s24 = vpop.sfrf %23
  %p25 = scmp.eq.s32.totalorder %s24, 0
  %p26 = pneg %p25
  %28 = shalt.err (%p26)

</llo_original>
